<compile_context>
chip_gen: v7x
topology: tpu7x:2x2x1
jax: 0.10.0
libtpu: 0.0.40
codegen_flags: <defaults>
</compile_context>

<pallas_src>
import jax
import jax.numpy as jnp
from jax.experimental import pallas as pl
from jax.experimental.pallas import tpu as pltpu


_LANE = 128
_MAX_BLOCK_BYTES = 8 * 1024 * 1024       # per-block data footprint cap
_MIN_SPLIT_BYTES = 2 * 1024 * 1024       # force >= 2 grid steps above this
_RAGGED_BLOCK_BYTES = 2 * 1024 * 1024    # per-buffer VMEM cap on the ragged path
_VMEM_LIMIT_BYTES = 48 * 1024 * 1024     # explicit scoped-VMEM limit (< v7x 64 MiB)


# ----------------------------------------------------------------------------
# Pallas kernel: identity pass-through (the only concrete semantics of
# BaseModel.forward at the base-class level).
# ----------------------------------------------------------------------------
def _copy_kernel(x_ref, o_ref):
    # Full-tile load/store of the current lane-dense block.
    o_ref[...] = x_ref[...]


def _pick_lane_width(n):
    """Largest lane-dense last dim (multiple of 128, <= 1024) dividing n."""
    for k in (1024, 512, 256, _LANE):
        if n % k == 0:
            return k
    return None


def _pick_row_tile(rows, lane_k, dtype):
    """Dtype-aware row tile under the byte budget; grid uses cdiv (partial ok)."""
    itemsize = jnp.dtype(dtype).itemsize
    align = max(8, 32 // itemsize)            # sublane packing: f32 8, bf16 16, i8 32
    if rows <= align:
        return rows                           # block == full extent (always legal)
    budget = max(align, (_MAX_BLOCK_BYTES // (lane_k * itemsize)) // align * align)
    tile = min((rows // align) * align, budget)
    # For non-tiny arrays guarantee >= 2 grid steps so v7x's two TensorCores
    # both get work (near-zero cost on single-TC v5e/v6e).
    if tile == rows and rows * lane_k * itemsize > _MIN_SPLIT_BYTES:
        half = -(-rows // 2)                  # ceil(rows / 2)
        tile = -(-half // align) * align      # round up to sublane alignment
    return tile


def _ragged_passthrough(x):
    """Copy for total sizes not divisible by 128: (1, n) view, column tiles."""
    n = x.size
    itemsize = jnp.dtype(x.dtype).itemsize
    # A (1, C) VMEM block pads to 8 sublanes -> budget for the 8x footprint.
    budget_cols = max(_LANE, (_RAGGED_BLOCK_BYTES // (8 * itemsize)) // _LANE * _LANE)
    tile_cols = n if n <= budget_cols else budget_cols
    x2 = x.reshape(1, n)
    out2 = pl.pallas_call(
        _copy_kernel,
        out_shape=jax.ShapeDtypeStruct((1, n), x.dtype),
        grid_spec=pl.GridSpec(
            grid=(pl.cdiv(n, tile_cols),),
            in_specs=[pl.BlockSpec((1, tile_cols), lambda i: (0, i))],
            out_specs=pl.BlockSpec((1, tile_cols), lambda i: (0, i)),
        ),
        compiler_params=pltpu.CompilerParams(
            dimension_semantics=("parallel",),
            vmem_limit_bytes=_VMEM_LIMIT_BYTES,
        ),
    )(x2)
    return out2.reshape(x.shape)


@jax.jit
def pallas_passthrough(x: jax.Array) -> jax.Array:
    """Lane-dense tiled identity copy through VMEM (HBM-bandwidth bound)."""
    if x.size == 0:
        return x

    lane_k = _pick_lane_width(x.size)
    if lane_k is None:
        # Total size not a multiple of 128: lane-dense column tiles over a
        # (1, n) view; only the final partial block uses masked stores.
        return _ragged_passthrough(x)

    rows = x.size // lane_k
    tile_rows = _pick_row_tile(rows, lane_k, x.dtype)
    x2 = x.reshape(rows, lane_k)              # lane-dense 2D view (free under jit)

    out2 = pl.pallas_call(
        _copy_kernel,
        out_shape=jax.ShapeDtypeStruct((rows, lane_k), x.dtype),
        grid_spec=pl.GridSpec(
            grid=(pl.cdiv(rows, tile_rows),),
            in_specs=[pl.BlockSpec((tile_rows, lane_k), lambda i: (i, 0))],
            out_specs=pl.BlockSpec((tile_rows, lane_k), lambda i: (i, 0)),
        ),
        compiler_params=pltpu.CompilerParams(
            dimension_semantics=("parallel",),
            vmem_limit_bytes=_VMEM_LIMIT_BYTES,
        ),
    )(x2)

    return out2.reshape(x.shape)


# ----------------------------------------------------------------------------
# JAX-side mirror of the PyTorch BaseModel class structure.
# ----------------------------------------------------------------------------
class BaseModel:
    def __init__(self, cfg=None, phase="train", use_pallas_copy=True):
        self.cfg = cfg
        self.phase = phase
        self.use_pallas_copy = use_pallas_copy
        self.loss = None
        if self.phase in ["train", "val"]:
            self.loss = self.build_loss(self.cfg)

    def build_loss(self, cfg):
        # TODO(synk): original pulls a loss from an external registry
        # (..losses.build_loss); no Pallas equivalent -- return None placeholder.
        return None

    def _passthrough(self, data):
        # Literal BaseModel.forward performs no compute; the fastest path is
        # returning the array untouched (zero HBM traffic).  With
        # use_pallas_copy=True the data is routed through the on-device copy
        # kernel so the dispatcher's data path is exercised on TPU.
        if not self.use_pallas_copy:
            return data
        return pallas_passthrough(data)

    # In the original these raise NotImplementedError; subclasses override.
    def train_forward(self, data):
        return self._passthrough(data)

    def val_forward(self, data):
        return self._passthrough(data)

    def test_forward(self, data):
        return self._passthrough(data)

    def forward(self, data):
        if self.phase == "train":
            return self.train_forward(data)
        elif self.phase == "val":
            return self.val_forward(data)
        else:
            return self.test_forward(data)

    __call__ = forward


if __name__ == "__main__":
    key = jax.random.PRNGKey(0)
    # Small NCHW input: batch=2, channels=4, spatial=16x16
    x = jax.random.normal(key, (2, 4, 16, 16), dtype=jnp.float32)

    model = BaseModel(cfg=None, phase="train")   # use_pallas_copy=True -> kernel runs
    out = jax.block_until_ready(model(x))

    assert out.shape == x.shape
    assert out.dtype == x.dtype
    assert bool(jnp.allclose(out, x))
    print("KERNEL_OK")
</pallas_src>

<mosaic_0001>
module attributes {stable_mosaic.version = 11 : i64} {
  func.func @_copy_kernel(%arg0: i32, %arg1: memref<2x1024xf32, #tpu.memory_space<vmem>>, %arg2: memref<2x1024xf32, #tpu.memory_space<vmem>>) attributes {dimension_semantics = [#tpu.dimension_semantics<parallel>], iteration_bounds = array<i64: 1>, scalar_prefetch = 0 : i64, scratch_operands = 0 : i64, tpu.core_type = #tpu.core_type<tc>, window_params = [{transform_indices = @transform_0, window_bounds = array<i64: 2, 1024>}, {transform_indices = @transform_1, window_bounds = array<i64: 2, 1024>}]} {
    %c0 = arith.constant 0 : index
    %c0_0 = arith.constant 0 : index
    %0 = vector.load %arg1[%c0, %c0_0] : memref<2x1024xf32, #tpu.memory_space<vmem>>, vector<2x1024xf32>
    %c0_1 = arith.constant 0 : index
    %c0_2 = arith.constant 0 : index
    %1 = vector.load %arg2[%c0_1, %c0_2] : memref<2x1024xf32, #tpu.memory_space<vmem>>, vector<2x1024xf32>
    tpu.vector_store %arg2[%c0_1, %c0_2], %0 {strides = array<i32>} : memref<2x1024xf32, #tpu.memory_space<vmem>>, vector<2x1024xf32>,
    return
  }
  func.func @transform_0(%arg0: i32) -> (i32, i32) {
    %c0_i32 = arith.constant 0 : i32
    %c0_i32_0 = arith.constant 0 : i32
    return %arg0, %c0_i32 : i32, i32
  }
  func.func @transform_1(%arg0: i32) -> (i32, i32) {
    %c0_i32 = arith.constant 0 : i32
    %c0_i32_0 = arith.constant 0 : i32
    return %arg0, %c0_i32 : i32, i32
  }
}

</mosaic_0001>

<llo_original>
// kernel: pallas_passthrough.1
$region0: #{pallas_passthrough.1}
  #allocation0 [shape = 'u32[]', space=smem, size = 0x4, offset = 0x4, fixed_abs, tag = 'smem constant byte address 0x4 - core index']
  #allocation1 [shape = 'u32[144,128]{1,0:T(1,128)}', space=vmem, size = 0x12000, scoped, tag = 'internal scratch']
  %s0 = inlined_call_operand.vmem [shape: f32[2,1024], index: 0, kind: input, shape index: {}]
  %s1 = inlined_call_operand.vmem [shape: f32[2,1024], index: 1, kind: output, shape index: {}]
  %s2 = sld [smem:[#allocation0]]
  $region14: #{pallas_passthrough.1} parent=0
    _
  %s4 = ssub.s32 1, %s2
  %s5 = scalar_select 0, %s4, %s2
  // Predicated region
  $region2: #{pallas_passthrough.1} parent=0 // pred_check
    _
  $region3: #{pallas_passthrough.1} parent=0 // pred_check_branch
    %7 = sbr.rel (0) target = $region5
  $region4: #{pallas_passthrough.1} parent=0 // pred_region
    _
  $region5: #{pallas_passthrough.1} parent=0 // pred_fallthru
    _
  %v8 = vld [vmem:[%s0] sm:$0xff]
  %v9 = vld [vmem:[%s0 + $0x8] sm:$0xff]
  %10 = vst [vmem:[%s1] sm:$0xff] %v8
  %11 = vst [vmem:[%s1 + $0x8] sm:$0xff] %v9
  // Predicated region
  $region6: #{pallas_passthrough.1} parent=0 // pred_check
    _
  $region7: #{pallas_passthrough.1} parent=0 // pred_check_branch
    %13 = sbr.rel (0) target = $region9
  $region8: #{pallas_passthrough.1} parent=0 // pred_region
    _
  $region9: #{pallas_passthrough.1} parent=0 // pred_fallthru
    _
  // Predicated region
  $region10: #{pallas_passthrough.1} parent=0 // pred_check
    _
  $region11: #{pallas_passthrough.1} parent=0 // pred_check_branch
    %15 = sbr.rel (0) target = $region13
  $region12: #{pallas_passthrough.1} parent=0 // pred_region
    _
  $region13: #{pallas_passthrough.1} parent=0 // pred_fallthru
    _

</llo_original>
